<compile_context>
chip_gen: v7x
topology: tpu7x:2x2x1
jax: 0.10.0
libtpu: 0.0.40
codegen_flags: <defaults>
</compile_context>

<pallas_src>
import jax
import jax.numpy as jnp
from jax.experimental import pallas as pl
from jax.experimental.pallas import tpu as pltpu


_MXU_DTYPE = jnp.bfloat16


def _round_up(x, m):
    return pl.cdiv(x, m) * m


def _vmem_capacity_bytes():
    """Physical VMEM per TensorCore; conservative 64 MiB fallback (v7x floor)."""
    try:
        return int(pltpu.get_tpu_info().vmem_capacity_bytes)
    except Exception:
        return 64 << 20


# --------------------------------------------------------------------------------------
# Kernels
# --------------------------------------------------------------------------------------
def _ffn_resident_kernel(x_ref, w1_ref, b1_ref, w2_ref, b2_ref, o_ref):
    # Cast the x tile in-kernel (free VPU filler under the MXU; saves a wrapper HBM pass).
    xb = x_ref[...].astype(w1_ref.dtype)
    h = jnp.dot(xb, w1_ref[...], preferred_element_type=jnp.float32)   # MXU, f32 acc
    h = jnp.maximum(h + b1_ref[...], 0.0)                              # bias + ReLU in f32
    # Dropout(p=0.0) is the identity in the forward pass -> no-op.
    y = jnp.dot(h.astype(w2_ref.dtype), w2_ref[...],
                preferred_element_type=jnp.float32)
    o_ref[...] = (y + b2_ref[...]).astype(o_ref.dtype)


def _ffn_streamed_kernel(x_ref, w1_ref, b1_ref, w2_ref, b2_ref, o_ref, acc_ref):
    k = pl.program_id(1)

    @pl.when(k == 0)
    def _():
        acc_ref[...] = jnp.zeros_like(acc_ref)

    xb = x_ref[...].astype(w1_ref.dtype)
    h = jnp.dot(xb, w1_ref[...], preferred_element_type=jnp.float32)   # (tm, tf)
    h = jnp.maximum(h + b1_ref[...], 0.0)                              # ReLU is per-F-column
    acc_ref[...] += jnp.dot(h.astype(w2_ref.dtype), w2_ref[...],
                            preferred_element_type=jnp.float32)

    @pl.when(k == pl.num_programs(1) - 1)
    def _():
        o_ref[...] = (acc_ref[...] + b2_ref[...]).astype(o_ref.dtype)


# --------------------------------------------------------------------------------------
# Wrapper
# --------------------------------------------------------------------------------------
def feed_forward_network(x, w1, b1, w2, b2, *, tm=None, tf=None, force_stream=False):
    """x: [M, H]; w1: [H, F]; b1: [F]; w2: [F, H]; b2: [H]. Returns [M, H] in x.dtype."""
    M, H = x.shape
    F = w1.shape[1]
    out_dtype = x.dtype
    x_bpe = jnp.dtype(x.dtype).itemsize
    out_bpe = jnp.dtype(out_dtype).itemsize
    bpe = jnp.dtype(_MXU_DTYPE).itemsize

    vmem_cap = _vmem_capacity_bytes()
    vmem_budget = int(0.85 * vmem_cap)

    # ---- token-tile selection ----------------------------------------------------------
    m8 = _round_up(M, 8)
    tm_cap = 512
    if tm is None:
        if m8 <= 128:
            tm = m8                                      # whole problem in one block
        elif m8 <= 2 * tm_cap:
            tm = _round_up(pl.cdiv(m8, 2), 8)            # >= 2 parallel steps (v7x megacore)
        else:
            tm = tm_cap
    tm = min(tm, m8)
    m_pad = _round_up(M, tm)
    x_padded = x if m_pad == M else jnp.pad(x, ((0, m_pad - M), (0, 0)))
    nm = m_pad // tm

    # Weights / biases: one-time caller-side conversion (bf16 MXU operands, f32 biases).
    w1_mxu = w1.astype(_MXU_DTYPE)
    w2_mxu = w2.astype(_MXU_DTYPE)
    b1_2d = b1.astype(jnp.float32).reshape(1, F)
    b2_2d = b2.astype(jnp.float32).reshape(1, H)

    # ---- path selection: weight-resident vs F-streamed ---------------------------------
    resident_weight_bytes = (H * F + F * H) * bpe + (F + H) * 4        # single-buffered
    resident_need = (resident_weight_bytes
                     + 2 * tm * H * x_bpe                              # x tile (dbl-buffered)
                     + 2 * tm * H * out_bpe                            # out tile (dbl-buffered)
                     + tm * F * (4 + bpe))                             # f32 h + bf16 copy
    use_resident = (not force_stream) and resident_need <= vmem_budget

    if use_resident:
        # Limit sized to also cover a double-buffered-weights fallback.
        vmem_limit = int(min(max(int((resident_need + resident_weight_bytes) * 1.25),
                                 32 << 20),
                             int(0.9 * vmem_cap)))
        cost = pl.CostEstimate(
            flops=4 * m_pad * H * F,
            transcendentals=0,
            bytes_accessed=(m_pad * H * x_bpe + 2 * H * F * bpe
                            + (F + H) * 4 + m_pad * H * out_bpe))

        def _build(single_buffer_resident):
            res_kw = ({"pipeline_mode": pl.Buffered(1)}
                      if single_buffer_resident else {})
            return pl.pallas_call(
                _ffn_resident_kernel,
                out_shape=jax.ShapeDtypeStruct((m_pad, H), out_dtype),
                grid_spec=pltpu.PrefetchScalarGridSpec(
                    num_scalar_prefetch=0,
                    grid=(nm,),
                    in_specs=[
                        pl.BlockSpec((tm, H), lambda i: (i, 0)),            # x tile
                        pl.BlockSpec((H, F), lambda i: (0, 0), **res_kw),   # W1 resident
                        pl.BlockSpec((1, F), lambda i: (0, 0), **res_kw),   # b1 resident
                        pl.BlockSpec((F, H), lambda i: (0, 0), **res_kw),   # W2 resident
                        pl.BlockSpec((1, H), lambda i: (0, 0), **res_kw),   # b2 resident
                    ],
                    out_specs=pl.BlockSpec((tm, H), lambda i: (i, 0)),
                ),
                compiler_params=pltpu.CompilerParams(
                    dimension_semantics=("parallel",),
                    vmem_limit_bytes=vmem_limit,
                ),
                cost_estimate=cost,
            )

        try:
            out = _build(True)(x_padded, w1_mxu, b1_2d, w2_mxu, b2_2d)
        except Exception:
            # Fallback for jax versions without BlockSpec(pipeline_mode=...).
            out = _build(False)(x_padded, w1_mxu, b1_2d, w2_mxu, b2_2d)

    else:
        # -------- F-streamed accumulator path (transformer-scale H*F) -------------------
        if tf is None:
            tf = 512 if F >= 512 else _round_up(F, 128)
        tf = max(128, _round_up(min(tf, _round_up(F, 128)), 128))      # multiple of 128
        f_pad = _round_up(F, tf)
        if f_pad != F:
            # Zero-padded F columns: ReLU(0)=0 and zero W2 rows contribute nothing.
            w1_mxu = jnp.pad(w1_mxu, ((0, 0), (0, f_pad - F)))
            b1_2d = jnp.pad(b1_2d, ((0, 0), (0, f_pad - F)))
            w2_mxu = jnp.pad(w2_mxu, ((0, f_pad - F), (0, 0)))
        nf = f_pad // tf

        stream_need = (2 * tm * H * x_bpe + 2 * tm * H * out_bpe       # x / out tiles
                       + 2 * (H * tf + tf * H) * bpe + 2 * tf * 4      # W1/W2/b1 tiles (dbl)
                       + H * 4                                         # b2
                       + tm * H * 4                                    # f32 accumulator
                       + tm * tf * (4 + bpe))                          # f32 h + bf16 copy
        vmem_limit = int(min(max(int(stream_need * 1.5), 32 << 20), int(0.9 * vmem_cap)))
        cost = pl.CostEstimate(
            flops=4 * m_pad * H * f_pad,
            transcendentals=0,
            bytes_accessed=(m_pad * H * x_bpe + nm * 2 * H * f_pad * bpe
                            + (f_pad + H) * 4 + m_pad * H * out_bpe))

        out = pl.pallas_call(
            _ffn_streamed_kernel,
            out_shape=jax.ShapeDtypeStruct((m_pad, H), out_dtype),
            grid_spec=pltpu.PrefetchScalarGridSpec(
                num_scalar_prefetch=0,
                grid=(nm, nf),                                         # M parallel, F last
                in_specs=[
                    pl.BlockSpec((tm, H), lambda i, k: (i, 0)),        # x tile
                    pl.BlockSpec((H, tf), lambda i, k: (0, k)),        # W1 chunk
                    pl.BlockSpec((1, tf), lambda i, k: (0, k)),        # b1 chunk
                    pl.BlockSpec((tf, H), lambda i, k: (k, 0)),        # W2 chunk
                    pl.BlockSpec((1, H), lambda i, k: (0, 0)),         # b2
                ],
                out_specs=pl.BlockSpec((tm, H), lambda i, k: (i, 0)),
                scratch_shapes=[pltpu.VMEM((tm, H), jnp.float32)],     # accumulator
            ),
            compiler_params=pltpu.CompilerParams(
                dimension_semantics=("parallel", "arbitrary"),
                vmem_limit_bytes=vmem_limit,
            ),
            cost_estimate=cost,
        )(x_padded, w1_mxu, b1_2d, w2_mxu, b2_2d)

    if m_pad != M:
        out = out[:M]
    return out


# --------------------------------------------------------------------------------------
# References
# --------------------------------------------------------------------------------------
def ffn_reference_f32(x, w1, b1, w2, b2):
    h = jnp.maximum(x @ w1 + b1, 0.0)
    return h @ w2 + b2


def ffn_reference_bf16(x, w1, b1, w2, b2):
    # Precision-matched reference: bf16 MXU operands, f32 accumulation, f32 bias/ReLU.
    xb, w1b, w2b = (a.astype(jnp.bfloat16) for a in (x, w1, w2))
    h = jnp.dot(xb, w1b, preferred_element_type=jnp.float32) + b1
    h = jnp.maximum(h, 0.0).astype(jnp.bfloat16)
    return jnp.dot(h, w2b, preferred_element_type=jnp.float32) + b2


if __name__ == "__main__":
    key = jax.random.PRNGKey(0)
    ks = jax.random.split(key, 10)

    # --- Test 1: module toy shapes (hidden_dim=32, dim_feedforward=128, batch=2, seq=8)
    #             -> M=16 tokens, weight-resident path, grid=(1,).
    hidden_dim, dim_feedforward = 32, 128
    batch, seq = 2, 8
    M = batch * seq

    x = jax.random.normal(ks[0], (M, hidden_dim), dtype=jnp.float32)
    # PyTorch nn.Linear stores weight as [out, in]; build [in, out] so y = x @ W + b.
    w1 = jax.random.normal(ks[1], (hidden_dim, dim_feedforward), dtype=jnp.float32) * 0.05
    b1 = jax.random.normal(ks[2], (dim_feedforward,), dtype=jnp.float32) * 0.05
    w2 = jax.random.normal(ks[3], (dim_feedforward, hidden_dim), dtype=jnp.float32) * 0.05
    b2 = jax.random.normal(ks[4], (hidden_dim,), dtype=jnp.float32) * 0.05

    out = jax.block_until_ready(feed_forward_network(x, w1, b1, w2, b2))
    assert out.shape == (M, hidden_dim)
    assert jnp.allclose(out, ffn_reference_bf16(x, w1, b1, w2, b2), atol=2e-3, rtol=2e-3), \
        "resident path: mismatch vs precision-matched (bf16-MXU) reference"
    assert jnp.allclose(out, ffn_reference_f32(x, w1, b1, w2, b2), atol=3e-2, rtol=3e-2), \
        "resident path: mismatch vs full-f32 reference"

    # --- Test 2: exercise the F-streamed accumulator path (lane-dense H=128, grid=(2, 2)).
    H2, F2, M2 = 128, 256, 32
    x2 = jax.random.normal(ks[5], (M2, H2), dtype=jnp.float32)
    w1b = jax.random.normal(ks[6], (H2, F2), dtype=jnp.float32) * 0.05
    b1b = jax.random.normal(ks[7], (F2,), dtype=jnp.float32) * 0.05
    w2b = jax.random.normal(ks[8], (F2, H2), dtype=jnp.float32) * 0.05
    b2b = jax.random.normal(ks[9], (H2,), dtype=jnp.float32) * 0.05

    out2 = jax.block_until_ready(
        feed_forward_network(x2, w1b, b1b, w2b, b2b, tm=16, tf=128, force_stream=True))
    assert out2.shape == (M2, H2)
    assert jnp.allclose(out2, ffn_reference_bf16(x2, w1b, b1b, w2b, b2b), atol=2e-3, rtol=2e-3), \
        "streamed path: mismatch vs precision-matched (bf16-MXU) reference"
    assert jnp.allclose(out2, ffn_reference_f32(x2, w1b, b1b, w2b, b2b), atol=3e-2, rtol=3e-2), \
        "streamed path: mismatch vs full-f32 reference"

    # TODO(synk): Dropout with p > 0 (training mode) would need pltpu.prng_seed /
    # prng_random_bits; the module default p=0.0 makes it the identity, so it is omitted.
    print("KERNEL_OK")
</pallas_src>

<mosaic_0001>
module attributes {stable_mosaic.version = 11 : i64} {
  func.func @_ffn_resident_kernel(%arg0: i32, %arg1: memref<16x32xf32, #tpu.memory_space<vmem>>, %arg2: memref<32x128xbf16, #tpu.memory_space<vmem>>, %arg3: memref<1x128xf32, #tpu.memory_space<vmem>>, %arg4: memref<128x32xbf16, #tpu.memory_space<vmem>>, %arg5: memref<1x32xf32, #tpu.memory_space<vmem>>, %arg6: memref<16x32xf32, #tpu.memory_space<vmem>>) attributes {dimension_semantics = [#tpu.dimension_semantics<parallel>], iteration_bounds = array<i64: 1>, scalar_prefetch = 0 : i64, scratch_operands = 0 : i64, tpu.core_type = #tpu.core_type<tc>, window_params = [{transform_indices = @transform_0, window_bounds = array<i64: 16, 32>}, {pipeline_mode = #tpu.pipeline_mode<synchronous>, transform_indices = @transform_1, window_bounds = array<i64: 32, 128>}, {pipeline_mode = #tpu.pipeline_mode<synchronous>, transform_indices = @transform_2, window_bounds = array<i64: 1, 128>}, {pipeline_mode = #tpu.pipeline_mode<synchronous>, transform_indices = @transform_3, window_bounds = array<i64: 128, 32>}, {pipeline_mode = #tpu.pipeline_mode<synchronous>, transform_indices = @transform_4, window_bounds = array<i64: 1, 32>}, {transform_indices = @transform_5, window_bounds = array<i64: 16, 32>}]} {
    %c0 = arith.constant 0 : index
    %c0_0 = arith.constant 0 : index
    %0 = vector.load %arg1[%c0, %c0_0] : memref<16x32xf32, #tpu.memory_space<vmem>>, vector<16x32xf32>
    %1 = arith.truncf %0 : vector<16x32xf32> to vector<16x32xbf16>
    %c0_1 = arith.constant 0 : index
    %c0_2 = arith.constant 0 : index
    %2 = vector.load %arg2[%c0_1, %c0_2] : memref<32x128xbf16, #tpu.memory_space<vmem>>, vector<32x128xbf16>
    %cst = arith.constant dense<0.000000e+00> : vector<16x128xf32>
    %3 = tpu.matmul %1, %2, %cst {dimension_numbers = #tpu.dot_dimension_numbers<[1], [0], [0], [1], [0, 0, 1, 1], [], []>} : vector<16x32xbf16>, vector<32x128xbf16>, vector<16x128xf32> -> vector<16x128xf32>
    %c0_3 = arith.constant 0 : index
    %c0_4 = arith.constant 0 : index
    %4 = vector.load %arg3[%c0_3, %c0_4] : memref<1x128xf32, #tpu.memory_space<vmem>>, vector<1x128xf32>
    %5 = vector.broadcast %4 : vector<1x128xf32> to vector<16x128xf32>
    %6 = arith.addf %3, %5 : vector<16x128xf32>
    %cst_5 = arith.constant 0.000000e+00 : f32
    %7 = vector.broadcast %cst_5 : f32 to vector<16x128xf32>
    %8 = arith.maximumf %6, %7 : vector<16x128xf32>
    %9 = arith.truncf %8 : vector<16x128xf32> to vector<16x128xbf16>
    %c0_6 = arith.constant 0 : index
    %c0_7 = arith.constant 0 : index
    %10 = vector.load %arg4[%c0_6, %c0_7] : memref<128x32xbf16, #tpu.memory_space<vmem>>, vector<128x32xbf16>
    %cst_8 = arith.constant dense<0.000000e+00> : vector<16x32xf32>
    %11 = tpu.matmul %9, %10, %cst_8 {dimension_numbers = #tpu.dot_dimension_numbers<[1], [0], [0], [1], [0, 0, 1, 1], [], []>} : vector<16x128xbf16>, vector<128x32xbf16>, vector<16x32xf32> -> vector<16x32xf32>
    %c0_9 = arith.constant 0 : index
    %c0_10 = arith.constant 0 : index
    %12 = vector.load %arg5[%c0_9, %c0_10] : memref<1x32xf32, #tpu.memory_space<vmem>>, vector<1x32xf32>
    %13 = vector.broadcast %12 : vector<1x32xf32> to vector<16x32xf32>
    %14 = arith.addf %11, %13 : vector<16x32xf32>
    %c0_11 = arith.constant 0 : index
    %c0_12 = arith.constant 0 : index
    %15 = vector.load %arg6[%c0_11, %c0_12] : memref<16x32xf32, #tpu.memory_space<vmem>>, vector<16x32xf32>
    tpu.vector_store %arg6[%c0_11, %c0_12], %14 {strides = array<i32>} : memref<16x32xf32, #tpu.memory_space<vmem>>, vector<16x32xf32>,
    return
  }
  func.func @transform_0(%arg0: i32) -> (i32, i32) {
    %c0_i32 = arith.constant 0 : i32
    %c0_i32_0 = arith.constant 0 : i32
    return %arg0, %c0_i32 : i32, i32
  }
  func.func @transform_1(%arg0: i32) -> (i32, i32) {
    %c0_i32 = arith.constant 0 : i32
    %c0_i32_0 = arith.constant 0 : i32
    %c0_i32_1 = arith.constant 0 : i32
    return %c0_i32, %c0_i32_0 : i32, i32
  }
  func.func @transform_2(%arg0: i32) -> (i32, i32) {
    %c0_i32 = arith.constant 0 : i32
    %c0_i32_0 = arith.constant 0 : i32
    %c0_i32_1 = arith.constant 0 : i32
    return %c0_i32, %c0_i32_0 : i32, i32
  }
  func.func @transform_3(%arg0: i32) -> (i32, i32) {
    %c0_i32 = arith.constant 0 : i32
    %c0_i32_0 = arith.constant 0 : i32
    %c0_i32_1 = arith.constant 0 : i32
    return %c0_i32, %c0_i32_0 : i32, i32
  }
  func.func @transform_4(%arg0: i32) -> (i32, i32) {
    %c0_i32 = arith.constant 0 : i32
    %c0_i32_0 = arith.constant 0 : i32
    %c0_i32_1 = arith.constant 0 : i32
    return %c0_i32, %c0_i32_0 : i32, i32
  }
  func.func @transform_5(%arg0: i32) -> (i32, i32) {
    %c0_i32 = arith.constant 0 : i32
    %c0_i32_0 = arith.constant 0 : i32
    return %arg0, %c0_i32 : i32, i32
  }
}

module attributes {stable_mosaic.version = 11 : i64} {
  func.func @_ffn_resident_kernel(%arg0: i32, %arg1: memref<16x32xf32, #tpu.memory_space<vmem>>, %arg2: memref<32x128xbf16, #tpu.memory_space<vmem>>, %arg3: memref<1x128xf32, #tpu.memory_space<vmem>>, %arg4: memref<128x32xbf16, #tpu.memory_space<vmem>>, %arg5: memref<1x32xf32, #tpu.memory_space<vmem>>, %arg6: memref<16x32xf32, #tpu.memory_space<vmem>>) attributes {dimension_semantics = [#tpu.dimension_semantics<parallel>], iteration_bounds = array<i64: 1>, scalar_prefetch = 0 : i64, scratch_operands = 0 : i64, tpu.core_type = #tpu.core_type<tc>, window_params = [{transform_indices = @transform_0, window_bounds = array<i64: 16, 32>}, {pipeline_mode = #tpu.pipeline_mode<synchronous>, transform_indices = @transform_1, window_bounds = array<i64: 32, 128>}, {pipeline_mode = #tpu.pipeline_mode<synchronous>, transform_indices = @transform_2, window_bounds = array<i64: 1, 128>}, {pipeline_mode = #tpu.pipeline_mode<synchronous>, transform_indices = @transform_3, window_bounds = array<i64: 128, 32>}, {pipeline_mode = #tpu.pipeline_mode<synchronous>, transform_indices = @transform_4, window_bounds = array<i64: 1, 32>}, {transform_indices = @transform_5, window_bounds = array<i64: 16, 32>}]} {
    %c0 = arith.constant 0 : index
    %c0_0 = arith.constant 0 : index
    %0 = vector.load %arg1[%c0, %c0_0] : memref<16x32xf32, #tpu.memory_space<vmem>>, vector<16x32xf32>
    %1 = arith.truncf %0 : vector<16x32xf32> to vector<16x32xbf16>
    %c0_1 = arith.constant 0 : index
    %c0_2 = arith.constant 0 : index
    %2 = vector.load %arg2[%c0_1, %c0_2] : memref<32x128xbf16, #tpu.memory_space<vmem>>, vector<32x128xbf16>
    %cst = arith.constant dense<0.000000e+00> : vector<16x128xf32>
    %3 = tpu.matmul %1, %2, %cst {dimension_numbers = #tpu.dot_dimension_numbers<[1], [0], [0], [1], [0, 0, 1, 1], [], []>} : vector<16x32xbf16>, vector<32x128xbf16>, vector<16x128xf32> -> vector<16x128xf32>
    %c0_3 = arith.constant 0 : index
    %c0_4 = arith.constant 0 : index
    %4 = vector.load %arg3[%c0_3, %c0_4] : memref<1x128xf32, #tpu.memory_space<vmem>>, vector<1x128xf32>
    %5 = vector.broadcast %4 : vector<1x128xf32> to vector<16x128xf32>
    %6 = arith.addf %3, %5 : vector<16x128xf32>
    %cst_5 = arith.constant 0.000000e+00 : f32
    %7 = vector.broadcast %cst_5 : f32 to vector<16x128xf32>
    %8 = arith.maximumf %6, %7 : vector<16x128xf32>
    %9 = arith.truncf %8 : vector<16x128xf32> to vector<16x128xbf16>
    %c0_6 = arith.constant 0 : index
    %c0_7 = arith.constant 0 : index
    %10 = vector.load %arg4[%c0_6, %c0_7] : memref<128x32xbf16, #tpu.memory_space<vmem>>, vector<128x32xbf16>
    %cst_8 = arith.constant dense<0.000000e+00> : vector<16x32xf32>
    %11 = tpu.matmul %9, %10, %cst_8 {dimension_numbers = #tpu.dot_dimension_numbers<[1], [0], [0], [1], [0, 0, 1, 1], [], []>} : vector<16x128xbf16>, vector<128x32xbf16>, vector<16x32xf32> -> vector<16x32xf32>
    %c0_9 = arith.constant 0 : index
    %c0_10 = arith.constant 0 : index
    %12 = vector.load %arg5[%c0_9, %c0_10] : memref<1x32xf32, #tpu.memory_space<vmem>>, vector<1x32xf32>
    %13 = vector.broadcast %12 : vector<1x32xf32> to vector<16x32xf32>
    %14 = arith.addf %11, %13 : vector<16x32xf32>
    %c0_11 = arith.constant 0 : index
    %c0_12 = arith.constant 0 : index
    %15 = vector.load %arg6[%c0_11, %c0_12] : memref<16x32xf32, #tpu.memory_space<vmem>>, vector<16x32xf32>
    tpu.vector_store %arg6[%c0_11, %c0_12], %14 {strides = array<i32>} : memref<16x32xf32, #tpu.memory_space<vmem>>, vector<16x32xf32>,
    return
  }
  func.func @transform_0(%arg0: i32) -> (i32, i32) {
    %c0_i32 = arith.constant 0 : i32
    %c0_i32_0 = arith.constant 0 : i32
    return %arg0, %c0_i32 : i32, i32
  }
  func.func @transform_1(%arg0: i32) -> (i32, i32) {
    %c0_i32 = arith.constant 0 : i32
    %c0_i32_0 = arith.constant 0 : i32
    %c0_i32_1 = arith.constant 0 : i32
    return %c0_i32, %c0_i32_0 : i32, i32
  }
  func.func @transform_2(%arg0: i32) -> (i32, i32) {
    %c0_i32 = arith.constant 0 : i32
    %c0_i32_0 = arith.constant 0 : i32
    %c0_i32_1 = arith.constant 0 : i32
    return %c0_i32, %c0_i32_0 : i32, i32
  }
  func.func @transform_3(%arg0: i32) -> (i32, i32) {
    %c0_i32 = arith.constant 0 : i32
    %c0_i32_0 = arith.constant 0 : i32
    %c0_i32_1 = arith.constant 0 : i32
    return %c0_i32, %c0_i32_0 : i32, i32
  }
  func.func @transform_4(%arg0: i32) -> (i32, i32) {
    %c0_i32 = arith.constant 0 : i32
    %c0_i32_0 = arith.constant 0 : i32
    %c0_i32_1 = arith.constant 0 : i32
    return %c0_i32, %c0_i32_0 : i32, i32
  }
  func.func @transform_5(%arg0: i32) -> (i32, i32) {
    %c0_i32 = arith.constant 0 : i32
    %c0_i32_0 = arith.constant 0 : i32
    return %arg0, %c0_i32 : i32, i32
  }
}

</mosaic_0001>

<llo_original>
// kernel: tpu_custom_call.1
$region0: #{tpu_custom_call.1}
  #allocation0 [shape = 'u32[]', space=smem, size = 0x4, offset = 0x4, fixed_abs, tag = 'smem constant byte address 0x4 - core index']
  #allocation1 [shape = 'u32[144,128]{1,0:T(1,128)}', space=vmem, size = 0x12000, scoped, tag = 'internal scratch']
  %s0 = inlined_call_operand.vmem [shape: f32[16,32], index: 0, kind: input, shape index: {}]
  %s1 = inlined_call_operand.vmem [shape: bf16[32,128], index: 1, kind: input, shape index: {}]
  %s2 = inlined_call_operand.vmem [shape: f32[1,128], index: 2, kind: input, shape index: {}]
  %s3 = inlined_call_operand.vmem [shape: bf16[128,32], index: 3, kind: input, shape index: {}]
  %s4 = inlined_call_operand.vmem [shape: f32[1,32], index: 4, kind: input, shape index: {}]
  %s5 = inlined_call_operand.hbm [shape: f32[16,32], index: 5, kind: output, shape index: {}]
  %s6 = sld [smem:[#allocation0]]
  $region30: #{tpu_custom_call.1} parent=0
    _
  %s8 = ssub.s32 1, %s6
  %s9 = scalar_select 0, %s8, %s6
  $region1: #{tpu_custom_call.1} parent=0
    #allocation2 [shape = 'u8[8192]{0}', space=vmem, size = 0x2000, scoped, tag = 'output window, operand 0, single buffered']
    #allocation3 [shape = 's32[1]{0}', space=sflag, size = 0x4, scoped, tag = 'scoped memory for tpu_custom_call.1']
    %10 = vsyncpa [#allocation3], 0
    // Predicated region
    $region2: #{tpu_custom_call.1} parent=1 // pred_check
      _
    $region3: #{tpu_custom_call.1} parent=1 // pred_check_branch
      %12 = sbr.rel (0) target = $region5
    $region4: #{tpu_custom_call.1} parent=1 // pred_region
      _
    $region5: #{tpu_custom_call.1} parent=1 // pred_fallthru
      _
    // Predicated region
    $region6: #{tpu_custom_call.1} parent=1 // pred_check
      _
    $region7: #{tpu_custom_call.1} parent=1 // pred_check_branch
      %14 = sbr.rel (0) target = $region9
    $region8: #{tpu_custom_call.1} parent=1 // pred_region
      _
    $region9: #{tpu_custom_call.1} parent=1 // pred_fallthru
      _
    // Predicated region
    $region10: #{tpu_custom_call.1} parent=1 // pred_check
      _
    $region11: #{tpu_custom_call.1} parent=1 // pred_check_branch
      %16 = sbr.rel (0) target = $region13
    $region12: #{tpu_custom_call.1} parent=1 // pred_region
      _
    $region13: #{tpu_custom_call.1} parent=1 // pred_fallthru
      _
    // Predicated region
    $region14: #{tpu_custom_call.1} parent=1 // pred_check
      _
    $region15: #{tpu_custom_call.1} parent=1 // pred_check_branch
      %18 = sbr.rel (0) target = $region17
    $region16: #{tpu_custom_call.1} parent=1 // pred_region
      _
    $region17: #{tpu_custom_call.1} parent=1 // pred_fallthru
      _
    // Predicated region
    $region18: #{tpu_custom_call.1} parent=1 // pred_check
      _
    $region19: #{tpu_custom_call.1} parent=1 // pred_check_branch
      %20 = sbr.rel (0) target = $region21
    $region20: #{tpu_custom_call.1} parent=1 // pred_region
      _
    $region21: #{tpu_custom_call.1} parent=1 // pred_fallthru
      _
    %v22 = vld [vmem:[%s0] sm:$0xff]
    %v23 = vld [vmem:[%s0 + $0x8] sm:$0xff]
    %v24 = vpack.c.bf16 %v23, %v22
    %v25 = vld [vmem:[%s1] sm:$0xf]
    %v26 = vld [vmem:[%s1 + $0x4] sm:$0xf]
    %v27 = vld [vmem:[%s1 + $0x8] sm:$0xf]
    %v28 = vld [vmem:[%s1 + $0xc] sm:$0xf]
    %v29 = vld [vmem:[%s2] sm:$0x1]
    %v31 = vlaneseq
    %v32 = vshrl.u32 %v31, 7
    %v33 = vsub.s32 0, %v32
    %v34 = vrot.slane %v29, %v33
    %v40 = vunpack.c.l.b16 %v25
    %v41 = vunpack.c.l.b16 %v26
    %v42 = vunpack.c.l.b16 %v27
    %v43 = vunpack.c.l.b16 %v28
    %v44 = vpack.c.b16 %v41, %v40
    %v45 = vpack.c.b16 %v43, %v42
    %vm48 = vcmask 261120
    %v50 = vsel %vm48, %v24, 0
    %52 = vmatprep.subr.bf16.mxu0 0
    %53 = vmatpush1.bf16.msra.mxu0 %v44
    %54 = vmatprep.subr.bf16.mxu0 0
    %55 = vmatpush1.bf16.msra.mxu0 %v45
    %56 = vmatprep.subr.bf16.mxu0 0
    %57 = vmatpush1.bf16.msra.mxu0 0
    %58 = vmatprep.subr.bf16.mxu0 0
    %59 = vmatpush1.bf16.msra.mxu0 0
    %60 = vmatprep.subr.bf16.mxu0 0
    %61 = vmatpush1.bf16.msra.mxu0 0
    %62 = vmatprep.subr.bf16.mxu0 0
    %63 = vmatpush1.bf16.msra.mxu0 0
    %64 = vmatprep.subr.bf16.mxu0 0
    %65 = vmatpush1.bf16.msra.mxu0 0
    %66 = vmatprep.subr.bf16.mxu0 0
    %67 = vmatpush1.bf16.msra.mxu0 0
    %68 = vmatprep.subr.bf16.mxu0 0
    %69 = vmatpush1.bf16.msra.mxu0 0
    %70 = vmatprep.subr.bf16.mxu0 0
    %71 = vmatpush1.bf16.msra.mxu0 0
    %72 = vmatprep.subr.bf16.mxu0 0
    %73 = vmatpush1.bf16.msra.mxu0 0
    %74 = vmatprep.subr.bf16.mxu0 0
    %75 = vmatpush1.bf16.msra.mxu0 0
    %76 = vmatprep.subr.bf16.mxu0 0
    %77 = vmatpush1.bf16.msra.mxu0 0
    %78 = vmatprep.subr.bf16.mxu0 0
    %79 = vmatpush1.bf16.msra.mxu0 0
    %80 = vmatprep.subr.bf16.mxu0 0
    %81 = vmatpush1.bf16.msra.mxu0 0
    %82 = vmatprep.subr.bf16.mxu0 0
    %83 = vmatpush1.bf16.msra.mxu0 0
    %84 = vmatprep.mubr.bf16.mxu0 0
    %85 = vmatmul.mubr.bf16.gmra.mrb[0].mxu0 %v50
    %v86 = vpop.f32.mrb[0].mxu0
    %v87 = vadd.f32 %v34, %v86
    %v88 = vpop.f32.mrb[0].mxu0
    %v89 = vpop.f32.mrb[0].mxu0
    %v90 = vadd.f32 %v34, %v89
    %v91 = vpop.f32.mrb[0].mxu0
    %92 = vdwg.mxu0
    %v93 = vmax.f32 %v87, 0.0
    %v94 = vmax.f32 %v90, 0.0
    %v95 = vpack.c.bf16 %v94, %v93
    %v96 = vld [vmem:[%s3] sm:$0xf]
    %v97 = vld [vmem:[%s3 + $0x4] sm:$0xf]
    %v98 = vld [vmem:[%s3 + $0x8] sm:$0xf]
    %v99 = vld [vmem:[%s3 + $0xc] sm:$0xf]
    %v100 = vld [vmem:[%s3 + $0x10] sm:$0xf]
    %v101 = vld [vmem:[%s3 + $0x14] sm:$0xf]
    %v102 = vld [vmem:[%s3 + $0x18] sm:$0xf]
    %v103 = vld [vmem:[%s3 + $0x1c] sm:$0xf]
    %v104 = vld [vmem:[%s3 + $0x20] sm:$0xf]
    %v105 = vld [vmem:[%s3 + $0x24] sm:$0xf]
    %v106 = vld [vmem:[%s3 + $0x28] sm:$0xf]
    %v107 = vld [vmem:[%s3 + $0x2c] sm:$0xf]
    %v108 = vld [vmem:[%s3 + $0x30] sm:$0xf]
    %v109 = vld [vmem:[%s3 + $0x34] sm:$0xf]
    %v110 = vld [vmem:[%s3 + $0x38] sm:$0xf]
    %v111 = vld [vmem:[%s3 + $0x3c] sm:$0xf]
    %v112 = vld [vmem:[%s4] sm:$0x1]
    %v114 = vlaneseq
    %v115 = vshrl.u32 %v114, 7
    %v116 = vsub.s32 0, %v115
    %v117 = vrot.slane %v112, %v116
    %v135 = vunpack.c.l.b16 %v96
    %v136 = vunpack.c.l.b16 %v97
    %v137 = vunpack.c.l.b16 %v98
    %v138 = vunpack.c.l.b16 %v99
    %v139 = vunpack.c.l.b16 %v100
    %v140 = vunpack.c.l.b16 %v101
    %v141 = vunpack.c.l.b16 %v102
    %v142 = vunpack.c.l.b16 %v103
    %v143 = vunpack.c.l.b16 %v104
    %v144 = vunpack.c.l.b16 %v105
    %v145 = vunpack.c.l.b16 %v106
    %v146 = vunpack.c.l.b16 %v107
    %v147 = vunpack.c.l.b16 %v108
    %v148 = vunpack.c.l.b16 %v109
    %v149 = vunpack.c.l.b16 %v110
    %v150 = vunpack.c.l.b16 %v111
    %v151 = vpack.c.b16 %v136, %v135
    %v152 = vpack.c.b16 %v138, %v137
    %v153 = vpack.c.b16 %v140, %v139
    %v154 = vpack.c.b16 %v142, %v141
    %v155 = vpack.c.b16 %v144, %v143
    %v156 = vpack.c.b16 %v146, %v145
    %v157 = vpack.c.b16 %v148, %v147
    %v158 = vpack.c.b16 %v150, %v149
    %167 = vmatprep.subr.bf16.mxu0 0
    %168 = vmatpush1.bf16.msra.mxu0 %v151
    %169 = vmatprep.subr.bf16.mxu0 0
    %170 = vmatpush1.bf16.msra.mxu0 %v152
    %171 = vmatprep.subr.bf16.mxu0 0
    %172 = vmatpush1.bf16.msra.mxu0 %v153
    %173 = vmatprep.subr.bf16.mxu0 0
    %174 = vmatpush1.bf16.msra.mxu0 %v154
    %175 = vmatprep.subr.bf16.mxu0 0
    %176 = vmatpush1.bf16.msra.mxu0 %v155
    %177 = vmatprep.subr.bf16.mxu0 0
    %178 = vmatpush1.bf16.msra.mxu0 %v156
    %179 = vmatprep.subr.bf16.mxu0 0
    %180 = vmatpush1.bf16.msra.mxu0 %v157
    %181 = vmatprep.subr.bf16.mxu0 0
    %182 = vmatpush1.bf16.msra.mxu0 %v158
    %183 = vmatprep.subr.bf16.mxu0 0
    %184 = vmatpush1.bf16.msra.mxu0 0
    %185 = vmatprep.subr.bf16.mxu0 0
    %186 = vmatpush1.bf16.msra.mxu0 0
    %187 = vmatprep.subr.bf16.mxu0 0
    %188 = vmatpush1.bf16.msra.mxu0 0
    %189 = vmatprep.subr.bf16.mxu0 0
    %190 = vmatpush1.bf16.msra.mxu0 0
    %191 = vmatprep.subr.bf16.mxu0 0
    %192 = vmatpush1.bf16.msra.mxu0 0
    %193 = vmatprep.subr.bf16.mxu0 0
    %194 = vmatpush1.bf16.msra.mxu0 0
    %195 = vmatprep.subr.bf16.mxu0 0
    %196 = vmatpush1.bf16.msra.mxu0 0
    %197 = vmatprep.subr.bf16.mxu0 0
    %198 = vmatpush1.bf16.msra.mxu0 0
    %199 = vmatprep.mubr.bf16.mxu0 0
    %200 = vmatmul.mubr.bf16.gmra.mrb[0].mxu0 %v95
    %v201 = vpop.f32.mrb[0].mxu0
    %v202 = vadd.f32 %v117, %v201
    %v203 = vpop.f32.mrb[0].mxu0
    %v204 = vpop.f32.mrb[0].mxu0
    %v205 = vadd.f32 %v117, %v204
    %v206 = vpop.f32.mrb[0].mxu0
    %207 = vdwg.mxu0
    %208 = vst.msk [vmem:[#allocation2] sm:$0xff] %vm48, %v202
    %209 = vst.msk [vmem:[#allocation2 + $0x8] sm:$0xff] %vm48, %v205
    // Predicated region
    $region22: #{tpu_custom_call.1} parent=1 // pred_check
      _
    $region23: #{tpu_custom_call.1} parent=1 // pred_check_branch
      %211 = sbr.rel (0) target = $region25
    $region24: #{tpu_custom_call.1} parent=1 // pred_region
      %s213 = ssub.s32 256, 256
      %214 = vsyncadd [#allocation3], %s213
      %s215 = sshll.u32 [#allocation2], 4
      %s216 = int_to_ptr.vmem [resolvable:$true] %s215
      %221 = dma.vmem_to_hbm [thread:$0]  %s216, 256, %s5, [#allocation3], 128, 128, 8
    $region25: #{tpu_custom_call.1} parent=1 // pred_fallthru
      _
    // Predicated region
    $region26: #{tpu_custom_call.1} parent=1 // pred_check
      _
    $region27: #{tpu_custom_call.1} parent=1 // pred_check_branch
      %223 = sbr.rel (0) target = $region29
    $region28: #{tpu_custom_call.1} parent=1 // pred_region
      %224 = dma.done [#allocation3], 256
    $region29: #{tpu_custom_call.1} parent=1 // pred_fallthru
      _
    %225 = vsyncpa [#allocation3], 1

// kernel: tpu_custom_call.1
$region0: #{tpu_custom_call.1}
  #allocation0 [shape = 'u32[]', space=smem, size = 0x4, offset = 0x4, fixed_abs, tag = 'smem constant byte address 0x4 - core index']
  #allocation1 [shape = 'u32[144,128]{1,0:T(1,128)}', space=vmem, size = 0x12000, scoped, tag = 'internal scratch']
  %s0 = inlined_call_operand.vmem [shape: f32[16,32], index: 0, kind: input, shape index: {}]
  %s1 = inlined_call_operand.vmem [shape: bf16[32,128], index: 1, kind: input, shape index: {}]
  %s2 = inlined_call_operand.vmem [shape: f32[1,128], index: 2, kind: input, shape index: {}]
  %s3 = inlined_call_operand.vmem [shape: bf16[128,32], index: 3, kind: input, shape index: {}]
  %s4 = inlined_call_operand.vmem [shape: f32[1,32], index: 4, kind: input, shape index: {}]
  %s5 = inlined_call_operand.hbm [shape: f32[16,32], index: 5, kind: output, shape index: {}]
  %s6 = sld [smem:[#allocation0]]
  $region30: #{tpu_custom_call.1} parent=0
    _
  %s8 = ssub.s32 1, %s6
  %s9 = scalar_select 0, %s8, %s6
  $region1: #{tpu_custom_call.1} parent=0
    #allocation2 [shape = 'u8[8192]{0}', space=vmem, size = 0x2000, scoped, tag = 'output window, operand 0, single buffered']
    #allocation3 [shape = 's32[1]{0}', space=sflag, size = 0x4, scoped, tag = 'scoped memory for tpu_custom_call.1']
    %10 = vsyncpa [#allocation3], 0
    // Predicated region
    $region2: #{tpu_custom_call.1} parent=1 // pred_check
      _
    $region3: #{tpu_custom_call.1} parent=1 // pred_check_branch
      %12 = sbr.rel (0) target = $region5
    $region4: #{tpu_custom_call.1} parent=1 // pred_region
      _
    $region5: #{tpu_custom_call.1} parent=1 // pred_fallthru
      _
    // Predicated region
    $region6: #{tpu_custom_call.1} parent=1 // pred_check
      _
    $region7: #{tpu_custom_call.1} parent=1 // pred_check_branch
      %14 = sbr.rel (0) target = $region9
    $region8: #{tpu_custom_call.1} parent=1 // pred_region
      _
    $region9: #{tpu_custom_call.1} parent=1 // pred_fallthru
      _
    // Predicated region
    $region10: #{tpu_custom_call.1} parent=1 // pred_check
      _
    $region11: #{tpu_custom_call.1} parent=1 // pred_check_branch
      %16 = sbr.rel (0) target = $region13
    $region12: #{tpu_custom_call.1} parent=1 // pred_region
      _
    $region13: #{tpu_custom_call.1} parent=1 // pred_fallthru
      _
    // Predicated region
    $region14: #{tpu_custom_call.1} parent=1 // pred_check
      _
    $region15: #{tpu_custom_call.1} parent=1 // pred_check_branch
      %18 = sbr.rel (0) target = $region17
    $region16: #{tpu_custom_call.1} parent=1 // pred_region
      _
    $region17: #{tpu_custom_call.1} parent=1 // pred_fallthru
      _
    // Predicated region
    $region18: #{tpu_custom_call.1} parent=1 // pred_check
      _
    $region19: #{tpu_custom_call.1} parent=1 // pred_check_branch
      %20 = sbr.rel (0) target = $region21
    $region20: #{tpu_custom_call.1} parent=1 // pred_region
      _
    $region21: #{tpu_custom_call.1} parent=1 // pred_fallthru
      _
    %v22 = vld [vmem:[%s0] sm:$0xff]
    %v23 = vld [vmem:[%s0 + $0x8] sm:$0xff]
    %v24 = vpack.c.bf16 %v23, %v22
    %v25 = vld [vmem:[%s1] sm:$0xf]
    %v26 = vld [vmem:[%s1 + $0x4] sm:$0xf]
    %v27 = vld [vmem:[%s1 + $0x8] sm:$0xf]
    %v28 = vld [vmem:[%s1 + $0xc] sm:$0xf]
    %v29 = vld [vmem:[%s2] sm:$0x1]
    %v31 = vlaneseq
    %v32 = vshrl.u32 %v31, 7
    %v33 = vsub.s32 0, %v32
    %v34 = vrot.slane %v29, %v33
    %v40 = vunpack.c.l.b16 %v25
    %v41 = vunpack.c.l.b16 %v26
    %v42 = vunpack.c.l.b16 %v27
    %v43 = vunpack.c.l.b16 %v28
    %v44 = vpack.c.b16 %v41, %v40
    %v45 = vpack.c.b16 %v43, %v42
    %vm48 = vcmask 261120
    %v50 = vsel %vm48, %v24, 0
    %52 = vmatprep.subr.bf16.mxu0 0
    %53 = vmatpush1.bf16.msra.mxu0 %v44
    %54 = vmatprep.subr.bf16.mxu0 0
    %55 = vmatpush1.bf16.msra.mxu0 %v45
    %56 = vmatprep.subr.bf16.mxu0 0
    %57 = vmatpush1.bf16.msra.mxu0 0
    %58 = vmatprep.subr.bf16.mxu0 0
    %59 = vmatpush1.bf16.msra.mxu0 0
    %60 = vmatprep.subr.bf16.mxu0 0
    %61 = vmatpush1.bf16.msra.mxu0 0
    %62 = vmatprep.subr.bf16.mxu0 0
    %63 = vmatpush1.bf16.msra.mxu0 0
    %64 = vmatprep.subr.bf16.mxu0 0
    %65 = vmatpush1.bf16.msra.mxu0 0
    %66 = vmatprep.subr.bf16.mxu0 0
    %67 = vmatpush1.bf16.msra.mxu0 0
    %68 = vmatprep.subr.bf16.mxu0 0
    %69 = vmatpush1.bf16.msra.mxu0 0
    %70 = vmatprep.subr.bf16.mxu0 0
    %71 = vmatpush1.bf16.msra.mxu0 0
    %72 = vmatprep.subr.bf16.mxu0 0
    %73 = vmatpush1.bf16.msra.mxu0 0
    %74 = vmatprep.subr.bf16.mxu0 0
    %75 = vmatpush1.bf16.msra.mxu0 0
    %76 = vmatprep.subr.bf16.mxu0 0
    %77 = vmatpush1.bf16.msra.mxu0 0
    %78 = vmatprep.subr.bf16.mxu0 0
    %79 = vmatpush1.bf16.msra.mxu0 0
    %80 = vmatprep.subr.bf16.mxu0 0
    %81 = vmatpush1.bf16.msra.mxu0 0
    %82 = vmatprep.subr.bf16.mxu0 0
    %83 = vmatpush1.bf16.msra.mxu0 0
    %84 = vmatprep.mubr.bf16.mxu0 0
    %85 = vmatmul.mubr.bf16.gmra.mrb[0].mxu0 %v50
    %v86 = vpop.f32.mrb[0].mxu0
    %v87 = vadd.f32 %v34, %v86
    %v88 = vpop.f32.mrb[0].mxu0
    %v89 = vpop.f32.mrb[0].mxu0
    %v90 = vadd.f32 %v34, %v89
    %v91 = vpop.f32.mrb[0].mxu0
    %92 = vdwg.mxu0
    %v93 = vmax.f32 %v87, 0.0
    %v94 = vmax.f32 %v90, 0.0
    %v95 = vpack.c.bf16 %v94, %v93
    %v96 = vld [vmem:[%s3] sm:$0xf]
    %v97 = vld [vmem:[%s3 + $0x4] sm:$0xf]
    %v98 = vld [vmem:[%s3 + $0x8] sm:$0xf]
    %v99 = vld [vmem:[%s3 + $0xc] sm:$0xf]
    %v100 = vld [vmem:[%s3 + $0x10] sm:$0xf]
    %v101 = vld [vmem:[%s3 + $0x14] sm:$0xf]
    %v102 = vld [vmem:[%s3 + $0x18] sm:$0xf]
    %v103 = vld [vmem:[%s3 + $0x1c] sm:$0xf]
    %v104 = vld [vmem:[%s3 + $0x20] sm:$0xf]
    %v105 = vld [vmem:[%s3 + $0x24] sm:$0xf]
    %v106 = vld [vmem:[%s3 + $0x28] sm:$0xf]
    %v107 = vld [vmem:[%s3 + $0x2c] sm:$0xf]
    %v108 = vld [vmem:[%s3 + $0x30] sm:$0xf]
    %v109 = vld [vmem:[%s3 + $0x34] sm:$0xf]
    %v110 = vld [vmem:[%s3 + $0x38] sm:$0xf]
    %v111 = vld [vmem:[%s3 + $0x3c] sm:$0xf]
    %v112 = vld [vmem:[%s4] sm:$0x1]
    %v114 = vlaneseq
    %v115 = vshrl.u32 %v114, 7
    %v116 = vsub.s32 0, %v115
    %v117 = vrot.slane %v112, %v116
    %v135 = vunpack.c.l.b16 %v96
    %v136 = vunpack.c.l.b16 %v97
    %v137 = vunpack.c.l.b16 %v98
    %v138 = vunpack.c.l.b16 %v99
    %v139 = vunpack.c.l.b16 %v100
    %v140 = vunpack.c.l.b16 %v101
    %v141 = vunpack.c.l.b16 %v102
    %v142 = vunpack.c.l.b16 %v103
    %v143 = vunpack.c.l.b16 %v104
    %v144 = vunpack.c.l.b16 %v105
    %v145 = vunpack.c.l.b16 %v106
    %v146 = vunpack.c.l.b16 %v107
    %v147 = vunpack.c.l.b16 %v108
    %v148 = vunpack.c.l.b16 %v109
    %v149 = vunpack.c.l.b16 %v110
    %v150 = vunpack.c.l.b16 %v111
    %v151 = vpack.c.b16 %v136, %v135
    %v152 = vpack.c.b16 %v138, %v137
    %v153 = vpack.c.b16 %v140, %v139
    %v154 = vpack.c.b16 %v142, %v141
    %v155 = vpack.c.b16 %v144, %v143
    %v156 = vpack.c.b16 %v146, %v145
    %v157 = vpack.c.b16 %v148, %v147
    %v158 = vpack.c.b16 %v150, %v149
    %167 = vmatprep.subr.bf16.mxu0 0
    %168 = vmatpush1.bf16.msra.mxu0 %v151
    %169 = vmatprep.subr.bf16.mxu0 0
    %170 = vmatpush1.bf16.msra.mxu0 %v152
    %171 = vmatprep.subr.bf16.mxu0 0
    %172 = vmatpush1.bf16.msra.mxu0 %v153
    %173 = vmatprep.subr.bf16.mxu0 0
    %174 = vmatpush1.bf16.msra.mxu0 %v154
    %175 = vmatprep.subr.bf16.mxu0 0
    %176 = vmatpush1.bf16.msra.mxu0 %v155
    %177 = vmatprep.subr.bf16.mxu0 0
    %178 = vmatpush1.bf16.msra.mxu0 %v156
    %179 = vmatprep.subr.bf16.mxu0 0
    %180 = vmatpush1.bf16.msra.mxu0 %v157
    %181 = vmatprep.subr.bf16.mxu0 0
    %182 = vmatpush1.bf16.msra.mxu0 %v158
    %183 = vmatprep.subr.bf16.mxu0 0
    %184 = vmatpush1.bf16.msra.mxu0 0
    %185 = vmatprep.subr.bf16.mxu0 0
    %186 = vmatpush1.bf16.msra.mxu0 0
    %187 = vmatprep.subr.bf16.mxu0 0
    %188 = vmatpush1.bf16.msra.mxu0 0
    %189 = vmatprep.subr.bf16.mxu0 0
    %190 = vmatpush1.bf16.msra.mxu0 0
    %191 = vmatprep.subr.bf16.mxu0 0
    %192 = vmatpush1.bf16.msra.mxu0 0
    %193 = vmatprep.subr.bf16.mxu0 0
    %194 = vmatpush1.bf16.msra.mxu0 0
    %195 = vmatprep.subr.bf16.mxu0 0
    %196 = vmatpush1.bf16.msra.mxu0 0
    %197 = vmatprep.subr.bf16.mxu0 0
    %198 = vmatpush1.bf16.msra.mxu0 0
    %199 = vmatprep.mubr.bf16.mxu0 0
    %200 = vmatmul.mubr.bf16.gmra.mrb[0].mxu0 %v95
    %v201 = vpop.f32.mrb[0].mxu0
    %v202 = vadd.f32 %v117, %v201
    %v203 = vpop.f32.mrb[0].mxu0
    %v204 = vpop.f32.mrb[0].mxu0
    %v205 = vadd.f32 %v117, %v204
    %v206 = vpop.f32.mrb[0].mxu0
    %207 = vdwg.mxu0
    %208 = vst.msk [vmem:[#allocation2] sm:$0xff] %vm48, %v202
    %209 = vst.msk [vmem:[#allocation2 + $0x8] sm:$0xff] %vm48, %v205
    // Predicated region
    $region22: #{tpu_custom_call.1} parent=1 // pred_check
      _
    $region23: #{tpu_custom_call.1} parent=1 // pred_check_branch
      %211 = sbr.rel (0) target = $region25
    $region24: #{tpu_custom_call.1} parent=1 // pred_region
      %s213 = ssub.s32 256, 256
      %214 = vsyncadd [#allocation3], %s213
      %s215 = sshll.u32 [#allocation2], 4
      %s216 = int_to_ptr.vmem [resolvable:$true] %s215
      %221 = dma.vmem_to_hbm [thread:$0]  %s216, 256, %s5, [#allocation3], 128, 128, 8
    $region25: #{tpu_custom_call.1} parent=1 // pred_fallthru
      _
    // Predicated region
    $region26: #{tpu_custom_call.1} parent=1 // pred_check
      _
    $region27: #{tpu_custom_call.1} parent=1 // pred_check_branch
      %223 = sbr.rel (0) target = $region29
    $region28: #{tpu_custom_call.1} parent=1 // pred_region
      %224 = dma.done [#allocation3], 256
    $region29: #{tpu_custom_call.1} parent=1 // pred_fallthru
      _
    %225 = vsyncpa [#allocation3], 1

</llo_original>
